<compile_context>
chip_gen: v6e
topology: v6e:2x2x1
jax: 0.10.0
libtpu: 0.0.40
codegen_flags: <defaults>
</compile_context>

<pallas_src>
import functools

import jax
import jax.numpy as jnp
from jax.experimental import pallas as pl
from jax.experimental.pallas import tpu as pltpu


# Pyramid levels with H*W below this use plain fused XLA reductions instead of
# a pallas_call (per perf review: launch + per-step overhead dominates there).
_PALLAS_MIN_HW = 1024


# ---------------------------------------------------------------------------
# Bilinear interpolation (matches PyTorch align_corners=False, antialias=False)
# ---------------------------------------------------------------------------
def _interp_matrix(out_size: int, in_size: int) -> jnp.ndarray:
    """Row-stochastic (out_size, in_size) bilinear interpolation matrix."""
    scale = in_size / out_size
    src = (jnp.arange(out_size, dtype=jnp.float32) + 0.5) * scale - 0.5
    src = jnp.maximum(src, 0.0)                      # PyTorch clamps negative src to 0
    i0 = jnp.minimum(jnp.floor(src).astype(jnp.int32), in_size - 1)
    i1 = jnp.minimum(i0 + 1, in_size - 1)
    lam = src - i0.astype(jnp.float32)
    w = ((1.0 - lam)[:, None] * jax.nn.one_hot(i0, in_size, dtype=jnp.float32)
         + lam[:, None] * jax.nn.one_hot(i1, in_size, dtype=jnp.float32))
    return w


def bilinear_resize(x: jnp.ndarray, h_out: int, w_out: int) -> jnp.ndarray:
    """x: (B, C, H, W) -> (B, C, h_out, w_out), bilinear, align_corners=False."""
    _, _, h_in, w_in = x.shape
    wh = _interp_matrix(h_out, h_in)
    ww = _interp_matrix(w_out, w_in)
    return jnp.einsum('oh,bchw,pw->bcop', wh, x.astype(jnp.float32), ww)


# ---------------------------------------------------------------------------
# Pallas kernel: masked per-channel sums over batch and the lane axis (H*W).
# Output is a single (C, 3) tile: [:,0]=sum(a*m), [:,1]=sum(a), [:,2]=sum(m)
# (broadcast over channels), reduced over batch AND space inside the kernel.
# ---------------------------------------------------------------------------
def _masked_sums_kernel(act_ref, mask_ref, out_ref, *, hw: int, tn: int):
    j = pl.program_id(0)

    @pl.when(j == 0)
    def _():
        out_ref[...] = jnp.zeros_like(out_ref)

    a = act_ref[...].astype(jnp.float32)    # (B, C, tn)
    m = mask_ref[...].astype(jnp.float32)   # (B, 1, tn)

    if hw % tn:
        # Final tile is ragged: zero lanes past the true row length so the
        # unspecified Pallas block padding never enters the sums.
        valid = (jax.lax.broadcasted_iota(jnp.int32, (1, 1, tn), 2) + j * tn) < hw
        a = jnp.where(valid, a, 0.0)
        m = jnp.where(valid, m, 0.0)

    # Per-tile reduction: batch collapse = pure VPU adds, then one XLU lane
    # reduce.  No (C, tn) accumulator RMW, no extra vector stores.
    am_b = jnp.sum(a * m, axis=0)                    # (C, tn)
    a_b = jnp.sum(a, axis=0)                         # (C, tn)
    m_b = jnp.sum(m, axis=0)                         # (1, tn)
    s_in = jnp.sum(am_b, axis=1, keepdims=True)      # (C, 1)
    s_all = jnp.sum(a_b, axis=1, keepdims=True)      # (C, 1)
    s_m = jnp.sum(m_b, axis=1, keepdims=True)        # (1, 1)

    c = s_in.shape[0]
    col = jax.lax.broadcasted_iota(jnp.int32, (c, 3), 1)
    packed = jnp.where(col == 0, s_in, jnp.where(col == 1, s_all, s_m))  # (C, 3)
    out_ref[...] += packed


@functools.lru_cache(maxsize=1)
def _tpu_vmem_capacity() -> int:
    try:
        return int(pltpu.get_tpu_info().vmem_capacity_bytes)
    except Exception:
        return 64 << 20   # conservative fallback (v7x per-core VMEM)


def _choose_tn(b: int, c: int, hw: int, budget_bytes: int) -> int:
    """Largest lane tile that fits the VMEM budget.  Returns the whole H*W row
    when it fits (full-dim blocks are exempt from the 128-lane rule), else a
    multiple of 128 (the final tile may then be ragged and is masked)."""
    per_lane = 4 * (2 * b * c + 2 * b)   # double-buffered act + mask blocks (f32 worst case)
    tn_fit = max(budget_bytes // per_lane, 128)
    if hw <= tn_fit:
        return hw
    return (tn_fit // 128) * 128


def _masked_channel_sums(act3: jnp.ndarray, mask3: jnp.ndarray, *,
                         tn_override: int | None = None) -> jnp.ndarray:
    """act3: (B, C, HW), mask3: (B, 1, HW).  Returns (C, 3) f32 totals over
    batch and space: [sum(a*m), sum(a), sum(m)]."""
    b, c, hw = act3.shape
    cap = _tpu_vmem_capacity()
    budget = max(cap // 4, 8 << 20)
    if tn_override is not None:           # testing hook; must be 128-multiple or >= hw
        tn = min(tn_override, hw)
    else:
        tn = _choose_tn(b, c, hw, budget)
    n_tiles = pl.cdiv(hw, tn)

    kernel = functools.partial(_masked_sums_kernel, hw=hw, tn=tn)
    bytes_accessed = (act3.size * act3.dtype.itemsize
                      + mask3.size * mask3.dtype.itemsize + c * 3 * 4)

    return pl.pallas_call(
        kernel,
        out_shape=jax.ShapeDtypeStruct((c, 3), jnp.float32),
        grid_spec=pltpu.PrefetchScalarGridSpec(
            num_scalar_prefetch=0,
            grid=(n_tiles,),
            in_specs=[
                pl.BlockSpec((b, c, tn), lambda j: (0, 0, j)),
                pl.BlockSpec((b, 1, tn), lambda j: (0, 0, j)),
            ],
            out_specs=pl.BlockSpec((c, 3), lambda j: (0, 0))),
        compiler_params=pltpu.CompilerParams(
            dimension_semantics=("arbitrary",),
            vmem_limit_bytes=int(min(cap, 2 * budget))),
        cost_estimate=pl.CostEstimate(
            flops=int(3 * b * c * hw),
            transcendentals=0,
            bytes_accessed=int(bytes_accessed)),
    )(act3, mask3)


def _scale_features(act: jnp.ndarray, mask_r: jnp.ndarray):
    """act: (B, C, H, W); mask_r: (B, 1, H, W) -> (inside (C,), outside (C,))."""
    b, c, h, w = act.shape
    hw = h * w
    m = mask_r.astype(jnp.float32)
    if hw >= _PALLAS_MIN_HW:
        # Free NCHW reshape; activations may be bf16 (cast happens in-kernel).
        sums = _masked_channel_sums(act.reshape(b, c, hw), m.reshape(b, 1, hw))
        s_in, s_all, s_m = sums[:, 0], sums[:, 1], sums[:, 2]
    else:
        # Tiny level: fused XLA reduce beats a pallas_call launch.
        a = act.astype(jnp.float32)
        s_in = jnp.sum(a * m, axis=(0, 2, 3))
        s_all = jnp.sum(a, axis=(0, 2, 3))
        s_m = jnp.broadcast_to(jnp.sum(m), s_in.shape)
    count = jnp.float32(b * hw)
    inside = s_in / s_m
    outside = (s_all - s_in) / (count - s_m)
    return inside, outside


# ---------------------------------------------------------------------------
# Module-equivalent forward — one fused jit (resizes + kernels + epilogues).
# Target spatial sizes are taken from the activation shapes (== self.shapes).
# ---------------------------------------------------------------------------
@jax.jit
def mask_to_features(activations: dict, mask: jnp.ndarray):
    features_inside = []
    features_outside = []
    for i in range(5):
        act = activations[str(i)]
        _, _, h, w = act.shape
        if i == 2:
            m = mask                                   # mask2 = mask (no resize)
        else:
            m = bilinear_resize(mask, h, w)            # F.interpolate bilinear
        fi, fo = _scale_features(act, m)
        features_inside.append(fi)
        features_outside.append(fo)
    return features_inside, features_outside


# ---------------------------------------------------------------------------
# Pure-JAX references for verification
# ---------------------------------------------------------------------------
def mask_to_features_ref(activations: dict, mask: jnp.ndarray):
    feats_in, feats_out = [], []
    for i in range(5):
        a = activations[str(i)].astype(jnp.float32)
        _, _, h, w = a.shape
        m = mask if i == 2 else bilinear_resize(mask, h, w)
        feats_in.append(jnp.sum(a * m, axis=(0, 2, 3)) / jnp.sum(m, axis=(0, 2, 3)))
        feats_out.append(jnp.sum(a * (1.0 - m), axis=(0, 2, 3))
                         / jnp.sum(1.0 - m, axis=(0, 2, 3)))
    return feats_in, feats_out


def _sums_ref(act3: jnp.ndarray, mask3: jnp.ndarray) -> jnp.ndarray:
    a = act3.astype(jnp.float32)
    m = mask3.astype(jnp.float32)
    s_in = jnp.sum(a * m, axis=(0, 2))
    s_all = jnp.sum(a, axis=(0, 2))
    s_m = jnp.broadcast_to(jnp.sum(m), s_in.shape)
    return jnp.stack([s_in, s_all, s_m], axis=1)


if __name__ == "__main__":
    # Small deterministic example consistent with a 5-scale feature pyramid.
    shapes = {
        '0': (2, 4, 64, 64),
        '1': (2, 8, 32, 32),
        '2': (2, 16, 16, 16),   # mask lives at this resolution (mask2 = mask)
        '3': (2, 32, 8, 8),
        '4': (2, 64, 4, 4),
    }

    key = jax.random.PRNGKey(0)
    keys = jax.random.split(key, 8)
    activations = {
        str(i): jax.random.normal(keys[i], shapes[str(i)], dtype=jnp.float32)
        for i in range(5)
    }
    mask = jax.random.uniform(keys[5], (2, 1, 16, 16), dtype=jnp.float32)

    feats_in, feats_out = mask_to_features(activations, mask)
    jax.block_until_ready(feats_in)
    jax.block_until_ready(feats_out)

    ref_in, ref_out = mask_to_features_ref(activations, mask)
    for i in range(5):
        assert feats_in[i].shape == (shapes[str(i)][1],)
        assert feats_out[i].shape == (shapes[str(i)][1],)
        assert jnp.allclose(feats_in[i], ref_in[i], rtol=1e-4, atol=1e-5)
        assert jnp.allclose(feats_out[i], ref_out[i], rtol=1e-4, atol=1e-5)

    # Direct kernel checks: multi-tile accumulation, ragged tail, bf16 input.
    a_mt = jax.random.normal(keys[6], (2, 8, 640), dtype=jnp.float32)
    m_mt = jax.random.uniform(keys[7], (2, 1, 640), dtype=jnp.float32)

    got = _masked_channel_sums(a_mt, m_mt, tn_override=128)          # 5 full tiles
    assert jnp.allclose(got, _sums_ref(a_mt, m_mt), rtol=1e-5, atol=1e-4)

    a_rg, m_rg = a_mt[:, :, :600], m_mt[:, :, :600]                  # ragged last tile
    got = _masked_channel_sums(a_rg, m_rg, tn_override=128)
    assert jnp.allclose(got, _sums_ref(a_rg, m_rg), rtol=1e-5, atol=1e-4)

    a_bf = a_mt.astype(jnp.bfloat16)                                 # bf16 activations
    got = _masked_channel_sums(a_bf, m_mt, tn_override=128)
    assert jnp.allclose(got, _sums_ref(a_bf, m_mt), rtol=1e-4, atol=1e-3)

    print("KERNEL_OK")
</pallas_src>

<mosaic_0001>
module attributes {stable_mosaic.version = 11 : i64} {
  func.func @_masked_sums_kernel(%arg0: i32, %arg1: memref<2x4x4096xf32, #tpu.memory_space<vmem>>, %arg2: memref<2x1x4096xf32, #tpu.memory_space<vmem>>, %arg3: memref<4x3xf32, #tpu.memory_space<vmem>>) attributes {dimension_semantics = [#tpu.dimension_semantics<arbitrary>], iteration_bounds = array<i64: 1>, scalar_prefetch = 0 : i64, scratch_operands = 0 : i64, tpu.core_type = #tpu.core_type<tc>, window_params = [{transform_indices = @transform_0, window_bounds = array<i64: 2, 4, 4096>}, {transform_indices = @transform_1, window_bounds = array<i64: 2, 1, 4096>}, {pipeline_mode = #tpu.pipeline_mode<synchronous>, transform_indices = @transform_2, window_bounds = array<i64: 4, 3>}]} {
    %c0_i32 = arith.constant 0 : i32
    %0 = arith.cmpi eq, %arg0, %c0_i32 : i32
    %1 = arith.extui %0 : i1 to i32
    %c0_i32_0 = arith.constant 0 : i32
    %2 = arith.cmpi ne, %1, %c0_i32_0 : i32
    scf.if %2 {
      %cst_16 = arith.constant 0.000000e+00 : f32
      %32 = vector.broadcast %cst_16 : f32 to vector<4x3xf32>
      %c0_17 = arith.constant 0 : index
      %c0_18 = arith.constant 0 : index
      %33 = vector.load %arg3[%c0_17, %c0_18] : memref<4x3xf32, #tpu.memory_space<vmem>>, vector<4x3xf32>
      tpu.vector_store %arg3[%c0_17, %c0_18], %32 {strides = array<i32>} : memref<4x3xf32, #tpu.memory_space<vmem>>, vector<4x3xf32>,
    } else {
    }
    %c0 = arith.constant 0 : index
    %c0_1 = arith.constant 0 : index
    %c0_2 = arith.constant 0 : index
    %3 = vector.load %arg1[%c0, %c0_1, %c0_2] : memref<2x4x4096xf32, #tpu.memory_space<vmem>>, vector<2x4x4096xf32>
    %c0_3 = arith.constant 0 : index
    %c0_4 = arith.constant 0 : index
    %c0_5 = arith.constant 0 : index
    %4 = vector.load %arg2[%c0_3, %c0_4, %c0_5] : memref<2x1x4096xf32, #tpu.memory_space<vmem>>, vector<2x1x4096xf32>
    %5 = vector.broadcast %4 : vector<2x1x4096xf32> to vector<2x4x4096xf32>
    %6 = arith.mulf %3, %5 : vector<2x4x4096xf32>
    %cst = arith.constant dense<0.000000e+00> : vector<4x4096xf32>
    %7 = vector.multi_reduction <add>, %6, %cst [0] : vector<2x4x4096xf32> to vector<4x4096xf32>
    %cst_6 = arith.constant dense<0.000000e+00> : vector<4x4096xf32>
    %8 = vector.multi_reduction <add>, %3, %cst_6 [0] : vector<2x4x4096xf32> to vector<4x4096xf32>
    %cst_7 = arith.constant dense<0.000000e+00> : vector<1x4096xf32>
    %9 = vector.multi_reduction <add>, %4, %cst_7 [0] : vector<2x1x4096xf32> to vector<1x4096xf32>
    %cst_8 = arith.constant dense<0.000000e+00> : vector<4xf32>
    %10 = vector.multi_reduction <add>, %7, %cst_8 [1] : vector<4x4096xf32> to vector<4xf32>
    %11 = vector.shape_cast %10 : vector<4xf32> to vector<4x1xf32>
    %cst_9 = arith.constant dense<0.000000e+00> : vector<4xf32>
    %12 = vector.multi_reduction <add>, %8, %cst_9 [1] : vector<4x4096xf32> to vector<4xf32>
    %13 = vector.shape_cast %12 : vector<4xf32> to vector<4x1xf32>
    %cst_10 = arith.constant dense<0.000000e+00> : vector<1xf32>
    %14 = vector.multi_reduction <add>, %9, %cst_10 [1] : vector<1x4096xf32> to vector<1xf32>
    %15 = vector.shape_cast %14 : vector<1xf32> to vector<1x1xf32>
    %16 = tpu.iota {dimensions = array<i32: 1>} : vector<4x3xi32>
    %c0_i32_11 = arith.constant 0 : i32
    %17 = vector.broadcast %c0_i32_11 : i32 to vector<4x3xi32>
    %18 = arith.cmpi eq, %16, %17 : vector<4x3xi32>
    %c1_i32 = arith.constant 1 : i32
    %19 = vector.broadcast %c1_i32 : i32 to vector<4x3xi32>
    %20 = arith.cmpi eq, %16, %19 : vector<4x3xi32>
    %21 = vector.shape_cast %13 : vector<4x1xf32> to vector<4x1xf32>
    %22 = vector.broadcast %21 : vector<4x1xf32> to vector<4x3xf32>
    %23 = vector.shape_cast %15 : vector<1x1xf32> to vector<1x1xf32>
    %24 = vector.broadcast %23 : vector<1x1xf32> to vector<4x3xf32>
    %25 = arith.select %20, %22, %24 : vector<4x3xi1>, vector<4x3xf32>
    %26 = vector.shape_cast %11 : vector<4x1xf32> to vector<4x1xf32>
    %27 = vector.broadcast %26 : vector<4x1xf32> to vector<4x3xf32>
    %28 = arith.select %18, %27, %25 : vector<4x3xi1>, vector<4x3xf32>
    %c0_12 = arith.constant 0 : index
    %c0_13 = arith.constant 0 : index
    %29 = vector.load %arg3[%c0_12, %c0_13] : memref<4x3xf32, #tpu.memory_space<vmem>>, vector<4x3xf32>
    %30 = arith.addf %29, %28 : vector<4x3xf32>
    %c0_14 = arith.constant 0 : index
    %c0_15 = arith.constant 0 : index
    %31 = vector.load %arg3[%c0_14, %c0_15] : memref<4x3xf32, #tpu.memory_space<vmem>>, vector<4x3xf32>
    tpu.vector_store %arg3[%c0_14, %c0_15], %30 {strides = array<i32>} : memref<4x3xf32, #tpu.memory_space<vmem>>, vector<4x3xf32>,
    return
  }
  func.func @transform_0(%arg0: i32) -> (i32, i32, i32) {
    %c0_i32 = arith.constant 0 : i32
    %c0_i32_0 = arith.constant 0 : i32
    %c0_i32_1 = arith.constant 0 : i32
    return %c0_i32, %c0_i32_0, %arg0 : i32, i32, i32
  }
  func.func @transform_1(%arg0: i32) -> (i32, i32, i32) {
    %c0_i32 = arith.constant 0 : i32
    %c0_i32_0 = arith.constant 0 : i32
    %c0_i32_1 = arith.constant 0 : i32
    return %c0_i32, %c0_i32_0, %arg0 : i32, i32, i32
  }
  func.func @transform_2(%arg0: i32) -> (i32, i32) {
    %c0_i32 = arith.constant 0 : i32
    %c0_i32_0 = arith.constant 0 : i32
    %c0_i32_1 = arith.constant 0 : i32
    return %c0_i32, %c0_i32_0 : i32, i32
  }
}

module attributes {stable_mosaic.version = 11 : i64} {
  func.func @_masked_sums_kernel(%arg0: i32, %arg1: memref<2x8x1024xf32, #tpu.memory_space<vmem>>, %arg2: memref<2x1x1024xf32, #tpu.memory_space<vmem>>, %arg3: memref<8x3xf32, #tpu.memory_space<vmem>>) attributes {dimension_semantics = [#tpu.dimension_semantics<arbitrary>], iteration_bounds = array<i64: 1>, scalar_prefetch = 0 : i64, scratch_operands = 0 : i64, tpu.core_type = #tpu.core_type<tc>, window_params = [{transform_indices = @transform_0, window_bounds = array<i64: 2, 8, 1024>}, {transform_indices = @transform_1, window_bounds = array<i64: 2, 1, 1024>}, {pipeline_mode = #tpu.pipeline_mode<synchronous>, transform_indices = @transform_2, window_bounds = array<i64: 8, 3>}]} {
    %c0_i32 = arith.constant 0 : i32
    %0 = arith.cmpi eq, %arg0, %c0_i32 : i32
    %1 = arith.extui %0 : i1 to i32
    %c0_i32_0 = arith.constant 0 : i32
    %2 = arith.cmpi ne, %1, %c0_i32_0 : i32
    scf.if %2 {
      %cst_16 = arith.constant 0.000000e+00 : f32
      %32 = vector.broadcast %cst_16 : f32 to vector<8x3xf32>
      %c0_17 = arith.constant 0 : index
      %c0_18 = arith.constant 0 : index
      %33 = vector.load %arg3[%c0_17, %c0_18] : memref<8x3xf32, #tpu.memory_space<vmem>>, vector<8x3xf32>
      tpu.vector_store %arg3[%c0_17, %c0_18], %32 {strides = array<i32>} : memref<8x3xf32, #tpu.memory_space<vmem>>, vector<8x3xf32>,
    } else {
    }
    %c0 = arith.constant 0 : index
    %c0_1 = arith.constant 0 : index
    %c0_2 = arith.constant 0 : index
    %3 = vector.load %arg1[%c0, %c0_1, %c0_2] : memref<2x8x1024xf32, #tpu.memory_space<vmem>>, vector<2x8x1024xf32>
    %c0_3 = arith.constant 0 : index
    %c0_4 = arith.constant 0 : index
    %c0_5 = arith.constant 0 : index
    %4 = vector.load %arg2[%c0_3, %c0_4, %c0_5] : memref<2x1x1024xf32, #tpu.memory_space<vmem>>, vector<2x1x1024xf32>
    %5 = vector.broadcast %4 : vector<2x1x1024xf32> to vector<2x8x1024xf32>
    %6 = arith.mulf %3, %5 : vector<2x8x1024xf32>
    %cst = arith.constant dense<0.000000e+00> : vector<8x1024xf32>
    %7 = vector.multi_reduction <add>, %6, %cst [0] : vector<2x8x1024xf32> to vector<8x1024xf32>
    %cst_6 = arith.constant dense<0.000000e+00> : vector<8x1024xf32>
    %8 = vector.multi_reduction <add>, %3, %cst_6 [0] : vector<2x8x1024xf32> to vector<8x1024xf32>
    %cst_7 = arith.constant dense<0.000000e+00> : vector<1x1024xf32>
    %9 = vector.multi_reduction <add>, %4, %cst_7 [0] : vector<2x1x1024xf32> to vector<1x1024xf32>
    %cst_8 = arith.constant dense<0.000000e+00> : vector<8xf32>
    %10 = vector.multi_reduction <add>, %7, %cst_8 [1] : vector<8x1024xf32> to vector<8xf32>
    %11 = vector.shape_cast %10 : vector<8xf32> to vector<8x1xf32>
    %cst_9 = arith.constant dense<0.000000e+00> : vector<8xf32>
    %12 = vector.multi_reduction <add>, %8, %cst_9 [1] : vector<8x1024xf32> to vector<8xf32>
    %13 = vector.shape_cast %12 : vector<8xf32> to vector<8x1xf32>
    %cst_10 = arith.constant dense<0.000000e+00> : vector<1xf32>
    %14 = vector.multi_reduction <add>, %9, %cst_10 [1] : vector<1x1024xf32> to vector<1xf32>
    %15 = vector.shape_cast %14 : vector<1xf32> to vector<1x1xf32>
    %16 = tpu.iota {dimensions = array<i32: 1>} : vector<8x3xi32>
    %c0_i32_11 = arith.constant 0 : i32
    %17 = vector.broadcast %c0_i32_11 : i32 to vector<8x3xi32>
    %18 = arith.cmpi eq, %16, %17 : vector<8x3xi32>
    %c1_i32 = arith.constant 1 : i32
    %19 = vector.broadcast %c1_i32 : i32 to vector<8x3xi32>
    %20 = arith.cmpi eq, %16, %19 : vector<8x3xi32>
    %21 = vector.shape_cast %13 : vector<8x1xf32> to vector<8x1xf32>
    %22 = vector.broadcast %21 : vector<8x1xf32> to vector<8x3xf32>
    %23 = vector.shape_cast %15 : vector<1x1xf32> to vector<1x1xf32>
    %24 = vector.broadcast %23 : vector<1x1xf32> to vector<8x3xf32>
    %25 = arith.select %20, %22, %24 : vector<8x3xi1>, vector<8x3xf32>
    %26 = vector.shape_cast %11 : vector<8x1xf32> to vector<8x1xf32>
    %27 = vector.broadcast %26 : vector<8x1xf32> to vector<8x3xf32>
    %28 = arith.select %18, %27, %25 : vector<8x3xi1>, vector<8x3xf32>
    %c0_12 = arith.constant 0 : index
    %c0_13 = arith.constant 0 : index
    %29 = vector.load %arg3[%c0_12, %c0_13] : memref<8x3xf32, #tpu.memory_space<vmem>>, vector<8x3xf32>
    %30 = arith.addf %29, %28 : vector<8x3xf32>
    %c0_14 = arith.constant 0 : index
    %c0_15 = arith.constant 0 : index
    %31 = vector.load %arg3[%c0_14, %c0_15] : memref<8x3xf32, #tpu.memory_space<vmem>>, vector<8x3xf32>
    tpu.vector_store %arg3[%c0_14, %c0_15], %30 {strides = array<i32>} : memref<8x3xf32, #tpu.memory_space<vmem>>, vector<8x3xf32>,
    return
  }
  func.func @transform_0(%arg0: i32) -> (i32, i32, i32) {
    %c0_i32 = arith.constant 0 : i32
    %c0_i32_0 = arith.constant 0 : i32
    %c0_i32_1 = arith.constant 0 : i32
    return %c0_i32, %c0_i32_0, %arg0 : i32, i32, i32
  }
  func.func @transform_1(%arg0: i32) -> (i32, i32, i32) {
    %c0_i32 = arith.constant 0 : i32
    %c0_i32_0 = arith.constant 0 : i32
    %c0_i32_1 = arith.constant 0 : i32
    return %c0_i32, %c0_i32_0, %arg0 : i32, i32, i32
  }
  func.func @transform_2(%arg0: i32) -> (i32, i32) {
    %c0_i32 = arith.constant 0 : i32
    %c0_i32_0 = arith.constant 0 : i32
    %c0_i32_1 = arith.constant 0 : i32
    return %c0_i32, %c0_i32_0 : i32, i32
  }
}

</mosaic_0001>

<llo_original>
// kernel: mask_to_features.3
$region0: #{mask_to_features.3}
  #allocation0 [shape = 'u32[]', space=smem, size = 0x4, offset = 0x4, fixed_abs, tag = 'smem constant byte address 0x4 - core index']
  #allocation1 [shape = 'u32[144,128]{1,0:T(1,128)}', space=vmem, size = 0x12000, scoped, tag = 'internal scratch']
  %s0 = inlined_call_operand.vmem [shape: f32[2,8,1024], index: 0, kind: input, shape index: {}]
  %s1 = inlined_call_operand.vmem [shape: f32[2,1,1024], index: 1, kind: input, shape index: {}]
  %s2 = inlined_call_operand.vmem [shape: f32[8,3], index: 2, kind: output, shape index: {}]
  %s3 = sld [smem:[#allocation0]]
  $region22: #{mask_to_features.3} parent=0
    _
  %s5 = ssub.s32 1, %s3
  %s6 = scalar_select 0, %s5, %s3
  // Predicated region
  $region2: #{mask_to_features.3} parent=0 // pred_check
    _
  $region3: #{mask_to_features.3} parent=0 // pred_check_branch
    %8 = sbr.rel (0) target = $region5
  $region4: #{mask_to_features.3} parent=0 // pred_region
    _
  $region5: #{mask_to_features.3} parent=0 // pred_fallthru
    _
  // Predicated region
  $region6: #{mask_to_features.3} parent=0 // pred_check
    _
  $region7: #{mask_to_features.3} parent=0 // pred_check_branch
    %10 = sbr.rel (0) target = $region9
  $region8: #{mask_to_features.3} parent=0 // pred_region
    _
  $region9: #{mask_to_features.3} parent=0 // pred_fallthru
    _
  %p11 = scmp.eq.s32.totalorder 0, 0
  // Predicated region
  $region10: #{mask_to_features.3} parent=0 // pred_check
    %p12 = pneg %p11
  $region11: #{mask_to_features.3} parent=0 // pred_check_branch
    %14 = sbr.rel (%p12) target = $region13
  $region12: #{mask_to_features.3} parent=0 // pred_region
    %vm15 = vcmask 23552
    %16 = vst.msk [vmem:[%s2] sm:$0xff] %vm15, 0.0
  $region13: #{mask_to_features.3} parent=0 // pred_fallthru
    _
  %v17 = vld [vmem:[%s0] sm:$0xff]
  %v18 = vld [vmem:[%s0 + $0x8] sm:$0xff]
  %v19 = vld [vmem:[%s0 + $0x10] sm:$0xff]
  %v20 = vld [vmem:[%s0 + $0x18] sm:$0xff]
  %v21 = vld [vmem:[%s0 + $0x20] sm:$0xff]
  %v22 = vld [vmem:[%s0 + $0x28] sm:$0xff]
  %v23 = vld [vmem:[%s0 + $0x30] sm:$0xff]
  %v24 = vld [vmem:[%s0 + $0x38] sm:$0xff]
  %v25 = vld [vmem:[%s0 + $0x40] sm:$0xff]
  %v26 = vld [vmem:[%s0 + $0x48] sm:$0xff]
  %v27 = vld [vmem:[%s0 + $0x50] sm:$0xff]
  %v28 = vld [vmem:[%s0 + $0x58] sm:$0xff]
  %v29 = vld [vmem:[%s0 + $0x60] sm:$0xff]
  %v30 = vld [vmem:[%s0 + $0x68] sm:$0xff]
  %v31 = vld [vmem:[%s0 + $0x70] sm:$0xff]
  %v32 = vld [vmem:[%s0 + $0x78] sm:$0xff]
  %v33 = vld [vmem:[%s1] sm:$0xff]
  %v34 = vld [vmem:[%s1 + $0x8] sm:$0xff]
  %v37 = vlaneseq
  %v38 = vshrl.u32 %v37, 7
  %v39 = vsub.s32 0, %v38
  %v40 = vrot.slane %v33, %v39
  %v41 = vlaneseq
  %v42 = vshrl.u32 %v41, 7
  %v43 = vsub.s32 1, %v42
  %v44 = vrot.slane %v33, %v43
  %v45 = vlaneseq
  %v46 = vshrl.u32 %v45, 7
  %v47 = vsub.s32 2, %v46
  %v48 = vrot.slane %v33, %v47
  %v49 = vlaneseq
  %v50 = vshrl.u32 %v49, 7
  %v51 = vsub.s32 3, %v50
  %v52 = vrot.slane %v33, %v51
  %v53 = vlaneseq
  %v54 = vshrl.u32 %v53, 7
  %v55 = vsub.s32 4, %v54
  %v56 = vrot.slane %v33, %v55
  %v57 = vlaneseq
  %v58 = vshrl.u32 %v57, 7
  %v59 = vsub.s32 5, %v58
  %v60 = vrot.slane %v33, %v59
  %v61 = vlaneseq
  %v62 = vshrl.u32 %v61, 7
  %v63 = vsub.s32 6, %v62
  %v64 = vrot.slane %v33, %v63
  %v65 = vlaneseq
  %v66 = vshrl.u32 %v65, 7
  %v67 = vsub.s32 7, %v66
  %v68 = vrot.slane %v33, %v67
  %v69 = vlaneseq
  %v70 = vshrl.u32 %v69, 7
  %v71 = vsub.s32 0, %v70
  %v72 = vrot.slane %v34, %v71
  %v73 = vlaneseq
  %v74 = vshrl.u32 %v73, 7
  %v75 = vsub.s32 1, %v74
  %v76 = vrot.slane %v34, %v75
  %v77 = vlaneseq
  %v78 = vshrl.u32 %v77, 7
  %v79 = vsub.s32 2, %v78
  %v80 = vrot.slane %v34, %v79
  %v81 = vlaneseq
  %v82 = vshrl.u32 %v81, 7
  %v83 = vsub.s32 3, %v82
  %v84 = vrot.slane %v34, %v83
  %v85 = vlaneseq
  %v86 = vshrl.u32 %v85, 7
  %v87 = vsub.s32 4, %v86
  %v88 = vrot.slane %v34, %v87
  %v89 = vlaneseq
  %v90 = vshrl.u32 %v89, 7
  %v91 = vsub.s32 5, %v90
  %v92 = vrot.slane %v34, %v91
  %v93 = vlaneseq
  %v94 = vshrl.u32 %v93, 7
  %v95 = vsub.s32 6, %v94
  %v96 = vrot.slane %v34, %v95
  %v97 = vlaneseq
  %v98 = vshrl.u32 %v97, 7
  %v99 = vsub.s32 7, %v98
  %v100 = vrot.slane %v34, %v99
  %v117 = vmul.f32 %v17, %v40
  %v118 = vmul.f32 %v18, %v44
  %v119 = vmul.f32 %v19, %v48
  %v120 = vmul.f32 %v20, %v52
  %v121 = vmul.f32 %v21, %v56
  %v122 = vmul.f32 %v22, %v60
  %v123 = vmul.f32 %v23, %v64
  %v124 = vmul.f32 %v24, %v68
  %v125 = vmul.f32 %v25, %v72
  %v126 = vmul.f32 %v26, %v76
  %v127 = vmul.f32 %v27, %v80
  %v128 = vmul.f32 %v28, %v84
  %v129 = vmul.f32 %v29, %v88
  %v130 = vmul.f32 %v30, %v92
  %v131 = vmul.f32 %v31, %v96
  %v132 = vmul.f32 %v32, %v100
  %v133 = vadd.f32 %v117, %v125
  %v134 = vadd.f32 %v118, %v126
  %v135 = vadd.f32 %v119, %v127
  %v136 = vadd.f32 %v120, %v128
  %v137 = vadd.f32 %v121, %v129
  %v138 = vadd.f32 %v122, %v130
  %v139 = vadd.f32 %v123, %v131
  %v140 = vadd.f32 %v124, %v132
  %v141 = vadd.f32 %v17, %v25
  %v142 = vadd.f32 %v18, %v26
  %v143 = vadd.f32 %v19, %v27
  %v144 = vadd.f32 %v20, %v28
  %v145 = vadd.f32 %v21, %v29
  %v146 = vadd.f32 %v22, %v30
  %v147 = vadd.f32 %v23, %v31
  %v148 = vadd.f32 %v24, %v32
  %vm149 = vcmask 1040384
  %v150 = vsel %vm149, %v40, 0.0
  %v151 = vsel %vm149, %v72, 0.0
  %v152 = vadd.f32 %v150, %v151
  %v153 = vsel %vm149, %v44, 0.0
  %v154 = vsel %vm149, %v76, 0.0
  %v155 = vadd.f32 %v153, %v154
  %v156 = vsel %vm149, %v48, 0.0
  %v157 = vsel %vm149, %v80, 0.0
  %v158 = vadd.f32 %v156, %v157
  %v159 = vsel %vm149, %v52, 0.0
  %v160 = vsel %vm149, %v84, 0.0
  %v161 = vadd.f32 %v159, %v160
  %v162 = vsel %vm149, %v56, 0.0
  %v163 = vsel %vm149, %v88, 0.0
  %v164 = vadd.f32 %v162, %v163
  %v165 = vsel %vm149, %v60, 0.0
  %v166 = vsel %vm149, %v92, 0.0
  %v167 = vadd.f32 %v165, %v166
  %v168 = vsel %vm149, %v64, 0.0
  %v169 = vsel %vm149, %v96, 0.0
  %v170 = vadd.f32 %v168, %v169
  %v171 = vsel %vm149, %v68, 0.0
  %v172 = vsel %vm149, %v100, 0.0
  %v173 = vadd.f32 %v171, %v172
  %v174 = vadd.f32 %v133, %v134
  %v175 = vadd.f32 %v174, %v135
  %v176 = vadd.f32 %v175, %v136
  %v177 = vadd.f32 %v176, %v137
  %v178 = vadd.f32 %v177, %v138
  %v179 = vadd.f32 %v178, %v139
  %v180 = vadd.f32 %v179, %v140
  %181 = vadd.xlane.f32.xlu0 %v180
  %v182 = vpop.xlane.xlu0 %181
  %v183 = vadd.f32 %v141, %v142
  %v184 = vadd.f32 %v183, %v143
  %v185 = vadd.f32 %v184, %v144
  %v186 = vadd.f32 %v185, %v145
  %v187 = vadd.f32 %v186, %v146
  %v188 = vadd.f32 %v187, %v147
  %v189 = vadd.f32 %v188, %v148
  %190 = vadd.xlane.f32.xlu0 %v189
  %v191 = vpop.xlane.xlu0 %190
  %v192 = vsel %vm149, %v152, 0.0
  %v193 = vsel %vm149, %v155, 0.0
  %v194 = vadd.f32 %v192, %v193
  %v195 = vsel %vm149, %v158, 0.0
  %v196 = vadd.f32 %v194, %v195
  %v197 = vsel %vm149, %v161, 0.0
  %v198 = vadd.f32 %v196, %v197
  %v199 = vsel %vm149, %v164, 0.0
  %v200 = vadd.f32 %v198, %v199
  %v201 = vsel %vm149, %v167, 0.0
  %v202 = vadd.f32 %v200, %v201
  %v203 = vsel %vm149, %v170, 0.0
  %v204 = vadd.f32 %v202, %v203
  %v205 = vsel %vm149, %v173, 0.0
  %v206 = vadd.f32 %v204, %v205
  %207 = vadd.xlane.f32.xlu0 %v206
  %v208 = vpop.xlane.xlu0 %207
  %v209 = vlaneseq
  %v210 = vand.u32 %v209, 127
  %vm211 = vcmp.eq.s32.totalorder %v210, 0
  %vm212 = vcmp.eq.s32.totalorder %v210, 1
  %v213 = vlaneseq
  %v214 = vshrl.u32 %v213, 7
  %v215 = vsub.s32 0, %v214
  %v216 = vrot.slane %v208, %v215
  %v217 = vsel %vm212, %v191, %v216
  %v218 = vsel %vm211, %v182, %v217
  %v219 = vld [vmem:[%s2] sm:$0xff]
  %v220 = vadd.f32 %v219, %v218
  %vm221 = vcmask 23552
  %222 = vst.msk [vmem:[%s2] sm:$0xff] %vm221, %v220
  // Predicated region
  $region14: #{mask_to_features.3} parent=0 // pred_check
    _
  $region15: #{mask_to_features.3} parent=0 // pred_check_branch
    %224 = sbr.rel (0) target = $region17
  $region16: #{mask_to_features.3} parent=0 // pred_region
    _
  $region17: #{mask_to_features.3} parent=0 // pred_fallthru
    _
  // Predicated region
  $region18: #{mask_to_features.3} parent=0 // pred_check
    _
  $region19: #{mask_to_features.3} parent=0 // pred_check_branch
    %226 = sbr.rel (0) target = $region21
  $region20: #{mask_to_features.3} parent=0 // pred_region
    _
  $region21: #{mask_to_features.3} parent=0 // pred_fallthru
    _

// kernel: mask_to_features.2
$region0: #{mask_to_features.2}
  #allocation0 [shape = 'u32[]', space=smem, size = 0x4, offset = 0x4, fixed_abs, tag = 'smem constant byte address 0x4 - core index']
  #allocation1 [shape = 'u32[144,128]{1,0:T(1,128)}', space=vmem, size = 0x12000, scoped, tag = 'internal scratch']
  %s0 = inlined_call_operand.vmem [shape: f32[2,4,4096], index: 0, kind: input, shape index: {}]
  %s1 = inlined_call_operand.vmem [shape: f32[2,1,4096], index: 1, kind: input, shape index: {}]
  %s2 = inlined_call_operand.vmem [shape: f32[4,3], index: 2, kind: output, shape index: {}]
  %s3 = sld [smem:[#allocation0]]
  $region22: #{mask_to_features.2} parent=0
    _
  %s5 = ssub.s32 1, %s3
  %s6 = scalar_select 0, %s5, %s3
  // Predicated region
  $region2: #{mask_to_features.2} parent=0 // pred_check
    _
  $region3: #{mask_to_features.2} parent=0 // pred_check_branch
    %8 = sbr.rel (0) target = $region5
  $region4: #{mask_to_features.2} parent=0 // pred_region
    _
  $region5: #{mask_to_features.2} parent=0 // pred_fallthru
    _
  // Predicated region
  $region6: #{mask_to_features.2} parent=0 // pred_check
    _
  $region7: #{mask_to_features.2} parent=0 // pred_check_branch
    %10 = sbr.rel (0) target = $region9
  $region8: #{mask_to_features.2} parent=0 // pred_region
    _
  $region9: #{mask_to_features.2} parent=0 // pred_fallthru
    _
  %p11 = scmp.eq.s32.totalorder 0, 0
  // Predicated region
  $region10: #{mask_to_features.2} parent=0 // pred_check
    %p12 = pneg %p11
  $region11: #{mask_to_features.2} parent=0 // pred_check_branch
    %14 = sbr.rel (%p12) target = $region13
  $region12: #{mask_to_features.2} parent=0 // pred_region
    %vm15 = vcmask 19456
    %16 = vst.msk [vmem:[%s2] sm:$0xf] %vm15, 0.0
  $region13: #{mask_to_features.2} parent=0 // pred_fallthru
    _
  %v17 = vld [vmem:[%s0] sm:$0xff]
  %v18 = vld [vmem:[%s0 + $0x8] sm:$0xff]
  %v19 = vld [vmem:[%s0 + $0x10] sm:$0xff]
  %v20 = vld [vmem:[%s0 + $0x18] sm:$0xff]
  %v21 = vld [vmem:[%s0 + $0x20] sm:$0xff]
  %v22 = vld [vmem:[%s0 + $0x28] sm:$0xff]
  %v23 = vld [vmem:[%s0 + $0x30] sm:$0xff]
  %v24 = vld [vmem:[%s0 + $0x38] sm:$0xff]
  %v25 = vld [vmem:[%s0 + $0x40] sm:$0xff]
  %v26 = vld [vmem:[%s0 + $0x48] sm:$0xff]
  %v27 = vld [vmem:[%s0 + $0x50] sm:$0xff]
  %v28 = vld [vmem:[%s0 + $0x58] sm:$0xff]
  %v29 = vld [vmem:[%s0 + $0x60] sm:$0xff]
  %v30 = vld [vmem:[%s0 + $0x68] sm:$0xff]
  %v31 = vld [vmem:[%s0 + $0x70] sm:$0xff]
  %v32 = vld [vmem:[%s0 + $0x78] sm:$0xff]
  %v33 = vld [vmem:[%s0 + $0x80] sm:$0xff]
  %v34 = vld [vmem:[%s0 + $0x88] sm:$0xff]
  %v35 = vld [vmem:[%s0 + $0x90] sm:$0xff]
  %v36 = vld [vmem:[%s0 + $0x98] sm:$0xff]
  %v37 = vld [vmem:[%s0 + $0xa0] sm:$0xff]
  %v38 = vld [vmem:[%s0 + $0xa8] sm:$0xff]
  %v39 = vld [vmem:[%s0 + $0xb0] sm:$0xff]
  %v40 = vld [vmem:[%s0 + $0xb8] sm:$0xff]
  %v41 = vld [vmem:[%s0 + $0xc0] sm:$0xff]
  %v42 = vld [vmem:[%s0 + $0xc8] sm:$0xff]
  %v43 = vld [vmem:[%s0 + $0xd0] sm:$0xff]
  %v44 = vld [vmem:[%s0 + $0xd8] sm:$0xff]
  %v45 = vld [vmem:[%s0 + $0xe0] sm:$0xff]
  %v46 = vld [vmem:[%s0 + $0xe8] sm:$0xff]
  %v47 = vld [vmem:[%s0 + $0xf0] sm:$0xff]
  %v48 = vld [vmem:[%s0 + $0xf8] sm:$0xff]
  %v49 = vld [vmem:[%s1] sm:$0xff]
  %v50 = vld [vmem:[%s1 + $0x8] sm:$0xff]
  %v51 = vld [vmem:[%s1 + $0x10] sm:$0xff]
  %v52 = vld [vmem:[%s1 + $0x18] sm:$0xff]
  %v53 = vld [vmem:[%s1 + $0x20] sm:$0xff]
  %v54 = vld [vmem:[%s1 + $0x28] sm:$0xff]
  %v55 = vld [vmem:[%s1 + $0x30] sm:$0xff]
  %v56 = vld [vmem:[%s1 + $0x38] sm:$0xff]
  %v65 = vlaneseq
  %v66 = vshrl.u32 %v65, 7
  %v67 = vsub.s32 0, %v66
  %v68 = vrot.slane %v49, %v67
  %v69 = vlaneseq
  %v70 = vshrl.u32 %v69, 7
  %v71 = vsub.s32 1, %v70
  %v72 = vrot.slane %v49, %v71
  %v73 = vlaneseq
  %v74 = vshrl.u32 %v73, 7
  %v75 = vsub.s32 2, %v74
  %v76 = vrot.slane %v49, %v75
  %v77 = vlaneseq
  %v78 = vshrl.u32 %v77, 7
  %v79 = vsub.s32 3, %v78
  %v80 = vrot.slane %v49, %v79
  %v81 = vlaneseq
  %v82 = vshrl.u32 %v81, 7
  %v83 = vsub.s32 4, %v82
  %v84 = vrot.slane %v49, %v83
  %v85 = vlaneseq
  %v86 = vshrl.u32 %v85, 7
  %v87 = vsub.s32 5, %v86
  %v88 = vrot.slane %v49, %v87
  %v89 = vlaneseq
  %v90 = vshrl.u32 %v89, 7
  %v91 = vsub.s32 6, %v90
  %v92 = vrot.slane %v49, %v91
  %v93 = vlaneseq
  %v94 = vshrl.u32 %v93, 7
  %v95 = vsub.s32 7, %v94
  %v96 = vrot.slane %v49, %v95
  %v97 = vlaneseq
  %v98 = vshrl.u32 %v97, 7
  %v99 = vsub.s32 0, %v98
  %v100 = vrot.slane %v50, %v99
  %v101 = vlaneseq
  %v102 = vshrl.u32 %v101, 7
  %v103 = vsub.s32 1, %v102
  %v104 = vrot.slane %v50, %v103
  %v105 = vlaneseq
  %v106 = vshrl.u32 %v105, 7
  %v107 = vsub.s32 2, %v106
  %v108 = vrot.slane %v50, %v107
  %v109 = vlaneseq
  %v110 = vshrl.u32 %v109, 7
  %v111 = vsub.s32 3, %v110
  %v112 = vrot.slane %v50, %v111
  %v113 = vlaneseq
  %v114 = vshrl.u32 %v113, 7
  %v115 = vsub.s32 4, %v114
  %v116 = vrot.slane %v50, %v115
  %v117 = vlaneseq
  %v118 = vshrl.u32 %v117, 7
  %v119 = vsub.s32 5, %v118
  %v120 = vrot.slane %v50, %v119
  %v121 = vlaneseq
  %v122 = vshrl.u32 %v121, 7
  %v123 = vsub.s32 6, %v122
  %v124 = vrot.slane %v50, %v123
  %v125 = vlaneseq
  %v126 = vshrl.u32 %v125, 7
  %v127 = vsub.s32 7, %v126
  %v128 = vrot.slane %v50, %v127
  %v129 = vlaneseq
  %v130 = vshrl.u32 %v129, 7
  %v131 = vsub.s32 0, %v130
  %v132 = vrot.slane %v51, %v131
  %v133 = vlaneseq
  %v134 = vshrl.u32 %v133, 7
  %v135 = vsub.s32 1, %v134
  %v136 = vrot.slane %v51, %v135
  %v137 = vlaneseq
  %v138 = vshrl.u32 %v137, 7
  %v139 = vsub.s32 2, %v138
  %v140 = vrot.slane %v51, %v139
  %v141 = vlaneseq
  %v142 = vshrl.u32 %v141, 7
  %v143 = vsub.s32 3, %v142
  %v144 = vrot.slane %v51, %v143
  %v145 = vlaneseq
  %v146 = vshrl.u32 %v145, 7
  %v147 = vsub.s32 4, %v146
  %v148 = vrot.slane %v51, %v147
  %v149 = vlaneseq
  %v150 = vshrl.u32 %v149, 7
  %v151 = vsub.s32 5, %v150
  %v152 = vrot.slane %v51, %v151
  %v153 = vlaneseq
  %v154 = vshrl.u32 %v153, 7
  %v155 = vsub.s32 6, %v154
  %v156 = vrot.slane %v51, %v155
  %v157 = vlaneseq
  %v158 = vshrl.u32 %v157, 7
  %v159 = vsub.s32 7, %v158
  %v160 = vrot.slane %v51, %v159
  %v161 = vlaneseq
  %v162 = vshrl.u32 %v161, 7
  %v163 = vsub.s32 0, %v162
  %v164 = vrot.slane %v52, %v163
  %v165 = vlaneseq
  %v166 = vshrl.u32 %v165, 7
  %v167 = vsub.s32 1, %v166
  %v168 = vrot.slane %v52, %v167
  %v169 = vlaneseq
  %v170 = vshrl.u32 %v169, 7
  %v171 = vsub.s32 2, %v170
  %v172 = vrot.slane %v52, %v171
  %v173 = vlaneseq
  %v174 = vshrl.u32 %v173, 7
  %v175 = vsub.s32 3, %v174
  %v176 = vrot.slane %v52, %v175
  %v177 = vlaneseq
  %v178 = vshrl.u32 %v177, 7
  %v179 = vsub.s32 4, %v178
  %v180 = vrot.slane %v52, %v179
  %v181 = vlaneseq
  %v182 = vshrl.u32 %v181, 7
  %v183 = vsub.s32 5, %v182
  %v184 = vrot.slane %v52, %v183
  %v185 = vlaneseq
  %v186 = vshrl.u32 %v185, 7
  %v187 = vsub.s32 6, %v186
  %v188 = vrot.slane %v52, %v187
  %v189 = vlaneseq
  %v190 = vshrl.u32 %v189, 7
  %v191 = vsub.s32 7, %v190
  %v192 = vrot.slane %v52, %v191
  %v193 = vlaneseq
  %v194 = vshrl.u32 %v193, 7
  %v195 = vsub.s32 0, %v194
  %v196 = vrot.slane %v53, %v195
  %v197 = vlaneseq
  %v198 = vshrl.u32 %v197, 7
  %v199 = vsub.s32 1, %v198
  %v200 = vrot.slane %v53, %v199
  %v201 = vlaneseq
  %v202 = vshrl.u32 %v201, 7
  %v203 = vsub.s32 2, %v202
  %v204 = vrot.slane %v53, %v203
  %v205 = vlaneseq
  %v206 = vshrl.u32 %v205, 7
  %v207 = vsub.s32 3, %v206
  %v208 = vrot.slane %v53, %v207
  %v209 = vlaneseq
  %v210 = vshrl.u32 %v209, 7
  %v211 = vsub.s32 4, %v210
  %v212 = vrot.slane %v53, %v211
  %v213 = vlaneseq
  %v214 = vshrl.u32 %v213, 7
  %v215 = vsub.s32 5, %v214
  %v216 = vrot.slane %v53, %v215
  %v217 = vlaneseq
  %v218 = vshrl.u32 %v217, 7
  %v219 = vsub.s32 6, %v218
  %v220 = vrot.slane %v53, %v219
  %v221 = vlaneseq
  %v222 = vshrl.u32 %v221, 7
  %v223 = vsub.s32 7, %v222
  %v224 = vrot.slane %v53, %v223
  %v225 = vlaneseq
  %v226 = vshrl.u32 %v225, 7
  %v227 = vsub.s32 0, %v226
  %v228 = vrot.slane %v54, %v227
  %v229 = vlaneseq
  %v230 = vshrl.u32 %v229, 7
  %v231 = vsub.s32 1, %v230
  %v232 = vrot.slane %v54, %v231
  %v233 = vlaneseq
  %v234 = vshrl.u32 %v233, 7
  %v235 = vsub.s32 2, %v234
  %v236 = vrot.slane %v54, %v235
  %v237 = vlaneseq
  %v238 = vshrl.u32 %v237, 7
  %v239 = vsub.s32 3, %v238
  %v240 = vrot.slane %v54, %v239
  %v241 = vlaneseq
  %v242 = vshrl.u32 %v241, 7
  %v243 = vsub.s32 4, %v242
  %v244 = vrot.slane %v54, %v243
  %v245 = vlaneseq
  %v246 = vshrl.u32 %v245, 7
  %v247 = vsub.s32 5, %v246
  %v248 = vrot.slane %v54, %v247
  %v249 = vlaneseq
  %v250 = vshrl.u32 %v249, 7
  %v251 = vsub.s32 6, %v250
  %v252 = vrot.slane %v54, %v251
  %v253 = vlaneseq
  %v254 = vshrl.u32 %v253, 7
  %v255 = vsub.s32 7, %v254
  %v256 = vrot.slane %v54, %v255
  %v257 = vlaneseq
  %v258 = vshrl.u32 %v257, 7
  %v259 = vsub.s32 0, %v258
  %v260 = vrot.slane %v55, %v259
  %v261 = vlaneseq
  %v262 = vshrl.u32 %v261, 7
  %v263 = vsub.s32 1, %v262
  %v264 = vrot.slane %v55, %v263
  %v265 = vlaneseq
  %v266 = vshrl.u32 %v265, 7
  %v267 = vsub.s32 2, %v266
  %v268 = vrot.slane %v55, %v267
  %v269 = vlaneseq
  %v270 = vshrl.u32 %v269, 7
  %v271 = vsub.s32 3, %v270
  %v272 = vrot.slane %v55, %v271
  %v273 = vlaneseq
  %v274 = vshrl.u32 %v273, 7
  %v275 = vsub.s32 4, %v274
  %v276 = vrot.slane %v55, %v275
  %v277 = vlaneseq
  %v278 = vshrl.u32 %v277, 7
  %v279 = vsub.s32 5, %v278
  %v280 = vrot.slane %v55, %v279
  %v281 = vlaneseq
  %v282 = vshrl.u32 %v281, 7
  %v283 = vsub.s32 6, %v282
  %v284 = vrot.slane %v55, %v283
  %v285 = vlaneseq
  %v286 = vshrl.u32 %v285, 7
  %v287 = vsub.s32 7, %v286
  %v288 = vrot.slane %v55, %v287
  %v289 = vlaneseq
  %v290 = vshrl.u32 %v289, 7
  %v291 = vsub.s32 0, %v290
  %v292 = vrot.slane %v56, %v291
  %v293 = vlaneseq
  %v294 = vshrl.u32 %v293, 7
  %v295 = vsub.s32 1, %v294
  %v296 = vrot.slane %v56, %v295
  %v297 = vlaneseq
  %v298 = vshrl.u32 %v297, 7
  %v299 = vsub.s32 2, %v298
  %v300 = vrot.slane %v56, %v299
  %v301 = vlaneseq
  %v302 = vshrl.u32 %v301, 7
  %v303 = vsub.s32 3, %v302
  %v304 = vrot.slane %v56, %v303
  %v305 = vlaneseq
  %v306 = vshrl.u32 %v305, 7
  %v307 = vsub.s32 4, %v306
  %v308 = vrot.slane %v56, %v307
  %v309 = vlaneseq
  %v310 = vshrl.u32 %v309, 7
  %v311 = vsub.s32 5, %v310
  %v312 = vrot.slane %v56, %v311
  %v313 = vlaneseq
  %v314 = vshrl.u32 %v313, 7
  %v315 = vsub.s32 6, %v314
  %v316 = vrot.slane %v56, %v315
  %v317 = vlaneseq
  %v318 = vshrl.u32 %v317, 7
  %v319 = vsub.s32 7, %v318
  %v320 = vrot.slane %v56, %v319
  %v321 = vcombine.low %v68, %v72
  %v322 = vcombine.low %v76, %v80
  %v323 = vcombine.low %v84, %v88
  %v324 = vcombine.low %v92, %v96
  %v325 = vcombine.low %v100, %v104
  %v326 = vcombine.low %v108, %v112
  %v327 = vcombine.low %v116, %v120
  %v328 = vcombine.low %v124, %v128
  %v329 = vcombine.low %v132, %v136
  %v330 = vcombine.low %v140, %v144
  %v331 = vcombine.low %v148, %v152
  %v332 = vcombine.low %v156, %v160
  %v333 = vcombine.low %v164, %v168
  %v334 = vcombine.low %v172, %v176
  %v335 = vcombine.low %v180, %v184
  %v336 = vcombine.low %v188, %v192
  %v337 = vcombine.low %v196, %v200
  %v338 = vcombine.low %v204, %v208
  %v339 = vcombine.low %v212, %v216
  %v340 = vcombine.low %v220, %v224
  %v341 = vcombine.low %v228, %v232
  %v342 = vcombine.low %v236, %v240
  %v343 = vcombine.low %v244, %v248
  %v344 = vcombine.low %v252, %v256
  %v345 = vcombine.low %v260, %v264
  %v346 = vcombine.low %v268, %v272
  %v347 = vcombine.low %v276, %v280
  %v348 = vcombine.low %v284, %v288
  %v349 = vcombine.low %v292, %v296
  %v350 = vcombine.low %v300, %v304
  %v351 = vcombine.low %v308, %v312
  %v352 = vcombine.low %v316, %v320
  %v385 = vmul.f32 %v17, %v321
  %v386 = vmul.f32 %v18, %v322
  %v387 = vmul.f32 %v19, %v323
  %v388 = vmul.f32 %v20, %v324
  %v389 = vmul.f32 %v21, %v325
  %v390 = vmul.f32 %v22, %v326
  %v391 = vmul.f32 %v23, %v327
  %v392 = vmul.f32 %v24, %v328
  %v393 = vmul.f32 %v25, %v329
  %v394 = vmul.f32 %v26, %v330
  %v395 = vmul.f32 %v27, %v331
  %v396 = vmul.f32 %v28, %v332
  %v397 = vmul.f32 %v29, %v333
  %v398 = vmul.f32 %v30, %v334
  %v399 = vmul.f32 %v31, %v335
  %v400 = vmul.f32 %v32, %v336
  %v401 = vmul.f32 %v33, %v337
  %v402 = vmul.f32 %v34, %v338
  %v403 = vmul.f32 %v35, %v339
  %v404 = vmul.f32 %v36, %v340
  %v405 = vmul.f32 %v37, %v341
  %v406 = vmul.f32 %v38, %v342
  %v407 = vmul.f32 %v39, %v343
  %v408 = vmul.f32 %v40, %v344
  %v409 = vmul.f32 %v41, %v345
  %v410 = vmul.f32 %v42, %v346
  %v411 = vmul.f32 %v43, %v347
  %v412 = vmul.f32 %v44, %v348
  %v413 = vmul.f32 %v45, %v349
  %v414 = vmul.f32 %v46, %v350
  %v415 = vmul.f32 %v47, %v351
  %v416 = vmul.f32 %v48, %v352
  %v449 = vcombine.high %v385, %v385
  %v450 = vcombine.high %v386, %v386
  %v451 = vcombine.high %v387, %v387
  %v452 = vcombine.high %v388, %v388
  %v453 = vcombine.high %v389, %v389
  %v454 = vcombine.high %v390, %v390
  %v455 = vcombine.high %v391, %v391
  %v456 = vcombine.high %v392, %v392
  %v457 = vcombine.high %v393, %v393
  %v458 = vcombine.high %v394, %v394
  %v459 = vcombine.high %v395, %v395
  %v460 = vcombine.high %v396, %v396
  %v461 = vcombine.high %v397, %v397
  %v462 = vcombine.high %v398, %v398
  %v463 = vcombine.high %v399, %v399
  %v464 = vcombine.high %v400, %v400
  %v465 = vcombine.high %v401, %v401
  %v466 = vcombine.high %v402, %v402
  %v467 = vcombine.high %v403, %v403
  %v468 = vcombine.high %v404, %v404
  %v469 = vcombine.high %v405, %v405
  %v470 = vcombine.high %v406, %v406
  %v471 = vcombine.high %v407, %v407
  %v472 = vcombine.high %v408, %v408
  %v473 = vcombine.high %v409, %v409
  %v474 = vcombine.high %v410, %v410
  %v475 = vcombine.high %v411, %v411
  %v476 = vcombine.high %v412, %v412
  %v477 = vcombine.high %v413, %v413
  %v478 = vcombine.high %v414, %v414
  %v479 = vcombine.high %v415, %v415
  %v480 = vcombine.high %v416, %v416
  %vm513 = vcmask 1043456
  %v514 = vsel %vm513, %v385, 0.0
  %v515 = vsel %vm513, %v401, 0.0
  %v516 = vadd.f32 %v514, %v515
  %v517 = vsel %vm513, %v449, 0.0
  %v518 = vsel %vm513, %v465, 0.0
  %v519 = vadd.f32 %v517, %v518
  %v520 = vsel %vm513, %v386, 0.0
  %v521 = vsel %vm513, %v402, 0.0
  %v522 = vadd.f32 %v520, %v521
  %v523 = vsel %vm513, %v450, 0.0
  %v524 = vsel %vm513, %v466, 0.0
  %v525 = vadd.f32 %v523, %v524
  %v526 = vsel %vm513, %v387, 0.0
  %v527 = vsel %vm513, %v403, 0.0
  %v528 = vadd.f32 %v526, %v527
  %v529 = vsel %vm513, %v451, 0.0
  %v530 = vsel %vm513, %v467, 0.0
  %v531 = vadd.f32 %v529, %v530
  %v532 = vsel %vm513, %v388, 0.0
  %v533 = vsel %vm513, %v404, 0.0
  %v534 = vadd.f32 %v532, %v533
  %v535 = vsel %vm513, %v452, 0.0
  %v536 = vsel %vm513, %v468, 0.0
  %v537 = vadd.f32 %v535, %v536
  %v538 = vsel %vm513, %v389, 0.0
  %v539 = vsel %vm513, %v405, 0.0
  %v540 = vadd.f32 %v538, %v539
  %v541 = vsel %vm513, %v453, 0.0
  %v542 = vsel %vm513, %v469, 0.0
  %v543 = vadd.f32 %v541, %v542
  %v544 = vsel %vm513, %v390, 0.0
  %v545 = vsel %vm513, %v406, 0.0
  %v546 = vadd.f32 %v544, %v545
  %v547 = vsel %vm513, %v454, 0.0
  %v548 = vsel %vm513, %v470, 0.0
  %v549 = vadd.f32 %v547, %v548
  %v550 = vsel %vm513, %v391, 0.0
  %v551 = vsel %vm513, %v407, 0.0
  %v552 = vadd.f32 %v550, %v551
  %v553 = vsel %vm513, %v455, 0.0
  %v554 = vsel %vm513, %v471, 0.0
  %v555 = vadd.f32 %v553, %v554
  %v556 = vsel %vm513, %v392, 0.0
  %v557 = vsel %vm513, %v408, 0.0
  %v558 = vadd.f32 %v556, %v557
  %v559 = vsel %vm513, %v456, 0.0
  %v560 = vsel %vm513, %v472, 0.0
  %v561 = vadd.f32 %v559, %v560
  %v562 = vsel %vm513, %v393, 0.0
  %v563 = vsel %vm513, %v409, 0.0
  %v564 = vadd.f32 %v562, %v563
  %v565 = vsel %vm513, %v457, 0.0
  %v566 = vsel %vm513, %v473, 0.0
  %v567 = vadd.f32 %v565, %v566
  %v568 = vsel %vm513, %v394, 0.0
  %v569 = vsel %vm513, %v410, 0.0
  %v570 = vadd.f32 %v568, %v569
  %v571 = vsel %vm513, %v458, 0.0
  %v572 = vsel %vm513, %v474, 0.0
  %v573 = vadd.f32 %v571, %v572
  %v574 = vsel %vm513, %v395, 0.0
  %v575 = vsel %vm513, %v411, 0.0
  %v576 = vadd.f32 %v574, %v575
  %v577 = vsel %vm513, %v459, 0.0
  %v578 = vsel %vm513, %v475, 0.0
  %v579 = vadd.f32 %v577, %v578
  %v580 = vsel %vm513, %v396, 0.0
  %v581 = vsel %vm513, %v412, 0.0
  %v582 = vadd.f32 %v580, %v581
  %v583 = vsel %vm513, %v460, 0.0
  %v584 = vsel %vm513, %v476, 0.0
  %v585 = vadd.f32 %v583, %v584
  %v586 = vsel %vm513, %v397, 0.0
  %v587 = vsel %vm513, %v413, 0.0
  %v588 = vadd.f32 %v586, %v587
  %v589 = vsel %vm513, %v461, 0.0
  %v590 = vsel %vm513, %v477, 0.0
  %v591 = vadd.f32 %v589, %v590
  %v592 = vsel %vm513, %v398, 0.0
  %v593 = vsel %vm513, %v414, 0.0
  %v594 = vadd.f32 %v592, %v593
  %v595 = vsel %vm513, %v462, 0.0
  %v596 = vsel %vm513, %v478, 0.0
  %v597 = vadd.f32 %v595, %v596
  %v598 = vsel %vm513, %v399, 0.0
  %v599 = vsel %vm513, %v415, 0.0
  %v600 = vadd.f32 %v598, %v599
  %v601 = vsel %vm513, %v463, 0.0
  %v602 = vsel %vm513, %v479, 0.0
  %v603 = vadd.f32 %v601, %v602
  %v604 = vsel %vm513, %v400, 0.0
  %v605 = vsel %vm513, %v416, 0.0
  %v606 = vadd.f32 %v604, %v605
  %v607 = vsel %vm513, %v464, 0.0
  %v608 = vsel %vm513, %v480, 0.0
  %v609 = vadd.f32 %v607, %v608
  %v642 = vcombine.high %v17, %v17
  %v643 = vcombine.high %v18, %v18
  %v644 = vcombine.high %v19, %v19
  %v645 = vcombine.high %v20, %v20
  %v646 = vcombine.high %v21, %v21
  %v647 = vcombine.high %v22, %v22
  %v648 = vcombine.high %v23, %v23
  %v649 = vcombine.high %v24, %v24
  %v650 = vcombine.high %v25, %v25
  %v651 = vcombine.high %v26, %v26
  %v652 = vcombine.high %v27, %v27
  %v653 = vcombine.high %v28, %v28
  %v654 = vcombine.high %v29, %v29
  %v655 = vcombine.high %v30, %v30
  %v656 = vcombine.high %v31, %v31
  %v657 = vcombine.high %v32, %v32
  %v658 = vcombine.high %v33, %v33
  %v659 = vcombine.high %v34, %v34
  %v660 = vcombine.high %v35, %v35
  %v661 = vcombine.high %v36, %v36
  %v662 = vcombine.high %v37, %v37
  %v663 = vcombine.high %v38, %v38
  %v664 = vcombine.high %v39, %v39
  %v665 = vcombine.high %v40, %v40
  %v666 = vcombine.high %v41, %v41
  %v667 = vcombine.high %v42, %v42
  %v668 = vcombine.high %v43, %v43
  %v669 = vcombine.high %v44, %v44
  %v670 = vcombine.high %v45, %v45
  %v671 = vcombine.high %v46, %v46
  %v672 = vcombine.high %v47, %v47
  %v673 = vcombine.high %v48, %v48
  %v706 = vsel %vm513, %v17, 0.0
  %v707 = vsel %vm513, %v33, 0.0
  %v708 = vadd.f32 %v706, %v707
  %v709 = vsel %vm513, %v642, 0.0
  %v710 = vsel %vm513, %v658, 0.0
  %v711 = vadd.f32 %v709, %v710
  %v712 = vsel %vm513, %v18, 0.0
  %v713 = vsel %vm513, %v34, 0.0
  %v714 = vadd.f32 %v712, %v713
  %v715 = vsel %vm513, %v643, 0.0
  %v716 = vsel %vm513, %v659, 0.0
  %v717 = vadd.f32 %v715, %v716
  %v718 = vsel %vm513, %v19, 0.0
  %v719 = vsel %vm513, %v35, 0.0
  %v720 = vadd.f32 %v718, %v719
  %v721 = vsel %vm513, %v644, 0.0
  %v722 = vsel %vm513, %v660, 0.0
  %v723 = vadd.f32 %v721, %v722
  %v724 = vsel %vm513, %v20, 0.0
  %v725 = vsel %vm513, %v36, 0.0
  %v726 = vadd.f32 %v724, %v725
  %v727 = vsel %vm513, %v645, 0.0
  %v728 = vsel %vm513, %v661, 0.0
  %v729 = vadd.f32 %v727, %v728
  %v730 = vsel %vm513, %v21, 0.0
  %v731 = vsel %vm513, %v37, 0.0
  %v732 = vadd.f32 %v730, %v731
  %v733 = vsel %vm513, %v646, 0.0
  %v734 = vsel %vm513, %v662, 0.0
  %v735 = vadd.f32 %v733, %v734
  %v736 = vsel %vm513, %v22, 0.0
  %v737 = vsel %vm513, %v38, 0.0
  %v738 = vadd.f32 %v736, %v737
  %v739 = vsel %vm513, %v647, 0.0
  %v740 = vsel %vm513, %v663, 0.0
  %v741 = vadd.f32 %v739, %v740
  %v742 = vsel %vm513, %v23, 0.0
  %v743 = vsel %vm513, %v39, 0.0
  %v744 = vadd.f32 %v742, %v743
  %v745 = vsel %vm513, %v648, 0.0
  %v746 = vsel %vm513, %v664, 0.0
  %v747 = vadd.f32 %v745, %v746
  %v748 = vsel %vm513, %v24, 0.0
  %v749 = vsel %vm513, %v40, 0.0
  %v750 = vadd.f32 %v748, %v749
  %v751 = vsel %vm513, %v649, 0.0
  %v752 = vsel %vm513, %v665, 0.0
  %v753 = vadd.f32 %v751, %v752
  %v754 = vsel %vm513, %v25, 0.0
  %v755 = vsel %vm513, %v41, 0.0
  %v756 = vadd.f32 %v754, %v755
  %v757 = vsel %vm513, %v650, 0.0
  %v758 = vsel %vm513, %v666, 0.0
  %v759 = vadd.f32 %v757, %v758
  %v760 = vsel %vm513, %v26, 0.0
  %v761 = vsel %vm513, %v42, 0.0
  %v762 = vadd.f32 %v760, %v761
  %v763 = vsel %vm513, %v651, 0.0
  %v764 = vsel %vm513, %v667, 0.0
  %v765 = vadd.f32 %v763, %v764
  %v766 = vsel %vm513, %v27, 0.0
  %v767 = vsel %vm513, %v43, 0.0
  %v768 = vadd.f32 %v766, %v767
  %v769 = vsel %vm513, %v652, 0.0
  %v770 = vsel %vm513, %v668, 0.0
  %v771 = vadd.f32 %v769, %v770
  %v772 = vsel %vm513, %v28, 0.0
  %v773 = vsel %vm513, %v44, 0.0
  %v774 = vadd.f32 %v772, %v773
  %v775 = vsel %vm513, %v653, 0.0
  %v776 = vsel %vm513, %v669, 0.0
  %v777 = vadd.f32 %v775, %v776
  %v778 = vsel %vm513, %v29, 0.0
  %v779 = vsel %vm513, %v45, 0.0
  %v780 = vadd.f32 %v778, %v779
  %v781 = vsel %vm513, %v654, 0.0
  %v782 = vsel %vm513, %v670, 0.0
  %v783 = vadd.f32 %v781, %v782
  %v784 = vsel %vm513, %v30, 0.0
  %v785 = vsel %vm513, %v46, 0.0
  %v786 = vadd.f32 %v784, %v785
  %v787 = vsel %vm513, %v655, 0.0
  %v788 = vsel %vm513, %v671, 0.0
  %v789 = vadd.f32 %v787, %v788
  %v790 = vsel %vm513, %v31, 0.0
  %v791 = vsel %vm513, %v47, 0.0
  %v792 = vadd.f32 %v790, %v791
  %v793 = vsel %vm513, %v656, 0.0
  %v794 = vsel %vm513, %v672, 0.0
  %v795 = vadd.f32 %v793, %v794
  %v796 = vsel %vm513, %v32, 0.0
  %v797 = vsel %vm513, %v48, 0.0
  %v798 = vadd.f32 %v796, %v797
  %v799 = vsel %vm513, %v657, 0.0
  %v800 = vsel %vm513, %v673, 0.0
  %v801 = vadd.f32 %v799, %v800
  %vm866 = vcmask 1040384
  %v867 = vsel %vm866, %v68, 0.0
  %v868 = vsel %vm866, %v196, 0.0
  %v869 = vadd.f32 %v867, %v868
  %v870 = vsel %vm866, %v72, 0.0
  %v871 = vsel %vm866, %v200, 0.0
  %v872 = vadd.f32 %v870, %v871
  %v873 = vsel %vm866, %v76, 0.0
  %v874 = vsel %vm866, %v204, 0.0
  %v875 = vadd.f32 %v873, %v874
  %v876 = vsel %vm866, %v80, 0.0
  %v877 = vsel %vm866, %v208, 0.0
  %v878 = vadd.f32 %v876, %v877
  %v879 = vsel %vm866, %v84, 0.0
  %v880 = vsel %vm866, %v212, 0.0
  %v881 = vadd.f32 %v879, %v880
  %v882 = vsel %vm866, %v88, 0.0
  %v883 = vsel %vm866, %v216, 0.0
  %v884 = vadd.f32 %v882, %v883
  %v885 = vsel %vm866, %v92, 0.0
  %v886 = vsel %vm866, %v220, 0.0
  %v887 = vadd.f32 %v885, %v886
  %v888 = vsel %vm866, %v96, 0.0
  %v889 = vsel %vm866, %v224, 0.0
  %v890 = vadd.f32 %v888, %v889
  %v891 = vsel %vm866, %v100, 0.0
  %v892 = vsel %vm866, %v228, 0.0
  %v893 = vadd.f32 %v891, %v892
  %v894 = vsel %vm866, %v104, 0.0
  %v895 = vsel %vm866, %v232, 0.0
  %v896 = vadd.f32 %v894, %v895
  %v897 = vsel %vm866, %v108, 0.0
  %v898 = vsel %vm866, %v236, 0.0
  %v899 = vadd.f32 %v897, %v898
  %v900 = vsel %vm866, %v112, 0.0
  %v901 = vsel %vm866, %v240, 0.0
  %v902 = vadd.f32 %v900, %v901
  %v903 = vsel %vm866, %v116, 0.0
  %v904 = vsel %vm866, %v244, 0.0
  %v905 = vadd.f32 %v903, %v904
  %v906 = vsel %vm866, %v120, 0.0
  %v907 = vsel %vm866, %v248, 0.0
  %v908 = vadd.f32 %v906, %v907
  %v909 = vsel %vm866, %v124, 0.0
  %v910 = vsel %vm866, %v252, 0.0
  %v911 = vadd.f32 %v909, %v910
  %v912 = vsel %vm866, %v128, 0.0
  %v913 = vsel %vm866, %v256, 0.0
  %v914 = vadd.f32 %v912, %v913
  %v915 = vsel %vm866, %v132, 0.0
  %v916 = vsel %vm866, %v260, 0.0
  %v917 = vadd.f32 %v915, %v916
  %v918 = vsel %vm866, %v136, 0.0
  %v919 = vsel %vm866, %v264, 0.0
  %v920 = vadd.f32 %v918, %v919
  %v921 = vsel %vm866, %v140, 0.0
  %v922 = vsel %vm866, %v268, 0.0
  %v923 = vadd.f32 %v921, %v922
  %v924 = vsel %vm866, %v144, 0.0
  %v925 = vsel %vm866, %v272, 0.0
  %v926 = vadd.f32 %v924, %v925
  %v927 = vsel %vm866, %v148, 0.0
  %v928 = vsel %vm866, %v276, 0.0
  %v929 = vadd.f32 %v927, %v928
  %v930 = vsel %vm866, %v152, 0.0
  %v931 = vsel %vm866, %v280, 0.0
  %v932 = vadd.f32 %v930, %v931
  %v933 = vsel %vm866, %v156, 0.0
  %v934 = vsel %vm866, %v284, 0.0
  %v935 = vadd.f32 %v933, %v934
  %v936 = vsel %vm866, %v160, 0.0
  %v937 = vsel %vm866, %v288, 0.0
  %v938 = vadd.f32 %v936, %v937
  %v939 = vsel %vm866, %v164, 0.0
  %v940 = vsel %vm866, %v292, 0.0
  %v941 = vadd.f32 %v939, %v940
  %v942 = vsel %vm866, %v168, 0.0
  %v943 = vsel %vm866, %v296, 0.0
  %v944 = vadd.f32 %v942, %v943
  %v945 = vsel %vm866, %v172, 0.0
  %v946 = vsel %vm866, %v300, 0.0
  %v947 = vadd.f32 %v945, %v946
  %v948 = vsel %vm866, %v176, 0.0
  %v949 = vsel %vm866, %v304, 0.0
  %v950 = vadd.f32 %v948, %v949
  %v951 = vsel %vm866, %v180, 0.0
  %v952 = vsel %vm866, %v308, 0.0
  %v953 = vadd.f32 %v951, %v952
  %v954 = vsel %vm866, %v184, 0.0
  %v955 = vsel %vm866, %v312, 0.0
  %v956 = vadd.f32 %v954, %v955
  %v957 = vsel %vm866, %v188, 0.0
  %v958 = vsel %vm866, %v316, 0.0
  %v959 = vadd.f32 %v957, %v958
  %v960 = vsel %vm866, %v192, 0.0
  %v961 = vsel %vm866, %v320, 0.0
  %v962 = vadd.f32 %v960, %v961
  %v963 = vsel %vm513, %v516, 0.0
  %v964 = vsel %vm513, %v519, 0.0
  %v965 = vadd.f32 %v963, %v964
  %v966 = vsel %vm513, %v522, 0.0
  %v967 = vadd.f32 %v965, %v966
  %v968 = vsel %vm513, %v525, 0.0
  %v969 = vadd.f32 %v967, %v968
  %v970 = vsel %vm513, %v528, 0.0
  %v971 = vadd.f32 %v969, %v970
  %v972 = vsel %vm513, %v531, 0.0
  %v973 = vadd.f32 %v971, %v972
  %v974 = vsel %vm513, %v534, 0.0
  %v975 = vadd.f32 %v973, %v974
  %v976 = vsel %vm513, %v537, 0.0
  %v977 = vadd.f32 %v975, %v976
  %v978 = vsel %vm513, %v540, 0.0
  %v979 = vadd.f32 %v977, %v978
  %v980 = vsel %vm513, %v543, 0.0
  %v981 = vadd.f32 %v979, %v980
  %v982 = vsel %vm513, %v546, 0.0
  %v983 = vadd.f32 %v981, %v982
  %v984 = vsel %vm513, %v549, 0.0
  %v985 = vadd.f32 %v983, %v984
  %v986 = vsel %vm513, %v552, 0.0
  %v987 = vadd.f32 %v985, %v986
  %v988 = vsel %vm513, %v555, 0.0
  %v989 = vadd.f32 %v987, %v988
  %v990 = vsel %vm513, %v558, 0.0
  %v991 = vadd.f32 %v989, %v990
  %v992 = vsel %vm513, %v561, 0.0
  %v993 = vadd.f32 %v991, %v992
  %v994 = vsel %vm513, %v564, 0.0
  %v995 = vadd.f32 %v993, %v994
  %v996 = vsel %vm513, %v567, 0.0
  %v997 = vadd.f32 %v995, %v996
  %v998 = vsel %vm513, %v570, 0.0
  %v999 = vadd.f32 %v997, %v998
  %v1000 = vsel %vm513, %v573, 0.0
  %v1001 = vadd.f32 %v999, %v1000
  %v1002 = vsel %vm513, %v576, 0.0
  %v1003 = vadd.f32 %v1001, %v1002
  %v1004 = vsel %vm513, %v579, 0.0
  %v1005 = vadd.f32 %v1003, %v1004
  %v1006 = vsel %vm513, %v582, 0.0
  %v1007 = vadd.f32 %v1005, %v1006
  %v1008 = vsel %vm513, %v585, 0.0
  %v1009 = vadd.f32 %v1007, %v1008
  %v1010 = vsel %vm513, %v588, 0.0
  %v1011 = vadd.f32 %v1009, %v1010
  %v1012 = vsel %vm513, %v591, 0.0
  %v1013 = vadd.f32 %v1011, %v1012
  %v1014 = vsel %vm513, %v594, 0.0
  %v1015 = vadd.f32 %v1013, %v1014
  %v1016 = vsel %vm513, %v597, 0.0
  %v1017 = vadd.f32 %v1015, %v1016
  %v1018 = vsel %vm513, %v600, 0.0
  %v1019 = vadd.f32 %v1017, %v1018
  %v1020 = vsel %vm513, %v603, 0.0
  %v1021 = vadd.f32 %v1019, %v1020
  %v1022 = vsel %vm513, %v606, 0.0
  %v1023 = vadd.f32 %v1021, %v1022
  %v1024 = vsel %vm513, %v609, 0.0
  %v1025 = vadd.f32 %v1023, %v1024
  %1026 = vadd.xlane.f32.xlu0 %v1025
  %v1027 = vpop.xlane.xlu0 %1026
  %v1028 = vsel %vm513, %v708, 0.0
  %v1029 = vsel %vm513, %v711, 0.0
  %v1030 = vadd.f32 %v1028, %v1029
  %v1031 = vsel %vm513, %v714, 0.0
  %v1032 = vadd.f32 %v1030, %v1031
  %v1033 = vsel %vm513, %v717, 0.0
  %v1034 = vadd.f32 %v1032, %v1033
  %v1035 = vsel %vm513, %v720, 0.0
  %v1036 = vadd.f32 %v1034, %v1035
  %v1037 = vsel %vm513, %v723, 0.0
  %v1038 = vadd.f32 %v1036, %v1037
  %v1039 = vsel %vm513, %v726, 0.0
  %v1040 = vadd.f32 %v1038, %v1039
  %v1041 = vsel %vm513, %v729, 0.0
  %v1042 = vadd.f32 %v1040, %v1041
  %v1043 = vsel %vm513, %v732, 0.0
  %v1044 = vadd.f32 %v1042, %v1043
  %v1045 = vsel %vm513, %v735, 0.0
  %v1046 = vadd.f32 %v1044, %v1045
  %v1047 = vsel %vm513, %v738, 0.0
  %v1048 = vadd.f32 %v1046, %v1047
  %v1049 = vsel %vm513, %v741, 0.0
  %v1050 = vadd.f32 %v1048, %v1049
  %v1051 = vsel %vm513, %v744, 0.0
  %v1052 = vadd.f32 %v1050, %v1051
  %v1053 = vsel %vm513, %v747, 0.0
  %v1054 = vadd.f32 %v1052, %v1053
  %v1055 = vsel %vm513, %v750, 0.0
  %v1056 = vadd.f32 %v1054, %v1055
  %v1057 = vsel %vm513, %v753, 0.0
  %v1058 = vadd.f32 %v1056, %v1057
  %v1059 = vsel %vm513, %v756, 0.0
  %v1060 = vadd.f32 %v1058, %v1059
  %v1061 = vsel %vm513, %v759, 0.0
  %v1062 = vadd.f32 %v1060, %v1061
  %v1063 = vsel %vm513, %v762, 0.0
  %v1064 = vadd.f32 %v1062, %v1063
  %v1065 = vsel %vm513, %v765, 0.0
  %v1066 = vadd.f32 %v1064, %v1065
  %v1067 = vsel %vm513, %v768, 0.0
  %v1068 = vadd.f32 %v1066, %v1067
  %v1069 = vsel %vm513, %v771, 0.0
  %v1070 = vadd.f32 %v1068, %v1069
  %v1071 = vsel %vm513, %v774, 0.0
  %v1072 = vadd.f32 %v1070, %v1071
  %v1073 = vsel %vm513, %v777, 0.0
  %v1074 = vadd.f32 %v1072, %v1073
  %v1075 = vsel %vm513, %v780, 0.0
  %v1076 = vadd.f32 %v1074, %v1075
  %v1077 = vsel %vm513, %v783, 0.0
  %v1078 = vadd.f32 %v1076, %v1077
  %v1079 = vsel %vm513, %v786, 0.0
  %v1080 = vadd.f32 %v1078, %v1079
  %v1081 = vsel %vm513, %v789, 0.0
  %v1082 = vadd.f32 %v1080, %v1081
  %v1083 = vsel %vm513, %v792, 0.0
  %v1084 = vadd.f32 %v1082, %v1083
  %v1085 = vsel %vm513, %v795, 0.0
  %v1086 = vadd.f32 %v1084, %v1085
  %v1087 = vsel %vm513, %v798, 0.0
  %v1088 = vadd.f32 %v1086, %v1087
  %v1089 = vsel %vm513, %v801, 0.0
  %v1090 = vadd.f32 %v1088, %v1089
  %1091 = vadd.xlane.f32.xlu0 %v1090
  %v1092 = vpop.xlane.xlu0 %1091
  %v1093 = vsel %vm866, %v869, 0.0
  %v1094 = vsel %vm866, %v872, 0.0
  %v1095 = vadd.f32 %v1093, %v1094
  %v1096 = vsel %vm866, %v875, 0.0
  %v1097 = vadd.f32 %v1095, %v1096
  %v1098 = vsel %vm866, %v878, 0.0
  %v1099 = vadd.f32 %v1097, %v1098
  %v1100 = vsel %vm866, %v881, 0.0
  %v1101 = vadd.f32 %v1099, %v1100
  %v1102 = vsel %vm866, %v884, 0.0
  %v1103 = vadd.f32 %v1101, %v1102
  %v1104 = vsel %vm866, %v887, 0.0
  %v1105 = vadd.f32 %v1103, %v1104
  %v1106 = vsel %vm866, %v890, 0.0
  %v1107 = vadd.f32 %v1105, %v1106
  %v1108 = vsel %vm866, %v893, 0.0
  %v1109 = vadd.f32 %v1107, %v1108
  %v1110 = vsel %vm866, %v896, 0.0
  %v1111 = vadd.f32 %v1109, %v1110
  %v1112 = vsel %vm866, %v899, 0.0
  %v1113 = vadd.f32 %v1111, %v1112
  %v1114 = vsel %vm866, %v902, 0.0
  %v1115 = vadd.f32 %v1113, %v1114
  %v1116 = vsel %vm866, %v905, 0.0
  %v1117 = vadd.f32 %v1115, %v1116
  %v1118 = vsel %vm866, %v908, 0.0
  %v1119 = vadd.f32 %v1117, %v1118
  %v1120 = vsel %vm866, %v911, 0.0
  %v1121 = vadd.f32 %v1119, %v1120
  %v1122 = vsel %vm866, %v914, 0.0
  %v1123 = vadd.f32 %v1121, %v1122
  %v1124 = vsel %vm866, %v917, 0.0
  %v1125 = vadd.f32 %v1123, %v1124
  %v1126 = vsel %vm866, %v920, 0.0
  %v1127 = vadd.f32 %v1125, %v1126
  %v1128 = vsel %vm866, %v923, 0.0
  %v1129 = vadd.f32 %v1127, %v1128
  %v1130 = vsel %vm866, %v926, 0.0
  %v1131 = vadd.f32 %v1129, %v1130
  %v1132 = vsel %vm866, %v929, 0.0
  %v1133 = vadd.f32 %v1131, %v1132
  %v1134 = vsel %vm866, %v932, 0.0
  %v1135 = vadd.f32 %v1133, %v1134
  %v1136 = vsel %vm866, %v935, 0.0
  %v1137 = vadd.f32 %v1135, %v1136
  %v1138 = vsel %vm866, %v938, 0.0
  %v1139 = vadd.f32 %v1137, %v1138
  %v1140 = vsel %vm866, %v941, 0.0
  %v1141 = vadd.f32 %v1139, %v1140
  %v1142 = vsel %vm866, %v944, 0.0
  %v1143 = vadd.f32 %v1141, %v1142
  %v1144 = vsel %vm866, %v947, 0.0
  %v1145 = vadd.f32 %v1143, %v1144
  %v1146 = vsel %vm866, %v950, 0.0
  %v1147 = vadd.f32 %v1145, %v1146
  %v1148 = vsel %vm866, %v953, 0.0
  %v1149 = vadd.f32 %v1147, %v1148
  %v1150 = vsel %vm866, %v956, 0.0
  %v1151 = vadd.f32 %v1149, %v1150
  %v1152 = vsel %vm866, %v959, 0.0
  %v1153 = vadd.f32 %v1151, %v1152
  %v1154 = vsel %vm866, %v962, 0.0
  %v1155 = vadd.f32 %v1153, %v1154
  %1156 = vadd.xlane.f32.xlu0 %v1155
  %v1157 = vpop.xlane.xlu0 %1156
  %v1158 = vlaneseq
  %v1159 = vand.u32 %v1158, 127
  %vm1160 = vcmp.eq.s32.totalorder %v1159, 0
  %vm1161 = vcmp.eq.s32.totalorder %v1159, 1
  %v1162 = vlaneseq
  %v1163 = vshrl.u32 %v1162, 7
  %v1164 = vsub.s32 0, %v1163
  %v1165 = vrot.slane %v1157, %v1164
  %v1166 = vsel %vm1161, %v1092, %v1165
  %v1167 = vsel %vm1160, %v1027, %v1166
  %v1168 = vld [vmem:[%s2] sm:$0xf]
  %v1169 = vadd.f32 %v1168, %v1167
  %vm1170 = vcmask 19456
  %1171 = vst.msk [vmem:[%s2] sm:$0xf] %vm1170, %v1169
  // Predicated region
  $region14: #{mask_to_features.2} parent=0 // pred_check
    _
  $region15: #{mask_to_features.2} parent=0 // pred_check_branch
    %1173 = sbr.rel (0) target = $region17
  $region16: #{mask_to_features.2} parent=0 // pred_region
    _
  $region17: #{mask_to_features.2} parent=0 // pred_fallthru
    _
  // Predicated region
  $region18: #{mask_to_features.2} parent=0 // pred_check
    _
  $region19: #{mask_to_features.2} parent=0 // pred_check_branch
    %1175 = sbr.rel (0) target = $region21
  $region20: #{mask_to_features.2} parent=0 // pred_region
    _
  $region21: #{mask_to_features.2} parent=0 // pred_fallthru
    _

</llo_original>
